<compile_context>
chip_gen: v6e
topology: v6e:2x2x1
jax: 0.10.0
libtpu: 0.0.40
codegen_flags: <defaults>
</compile_context>

<pallas_src>
import functools
import math

import jax
import jax.numpy as jnp
from jax import lax
from jax.experimental import pallas as pl
from jax.experimental.pallas import tpu as pltpu


# ---------------------------------------------------------------------------
# Fused Pallas kernel: bilinear grid-sample + sigmoid modulation + 1x1 conv
# ---------------------------------------------------------------------------
def _fused_dcn_kernel(x_ref, ox_ref, oy_ref, ml_ref, w_ref, out_ref, acc_ref,
                      *, C, H, W):
    # x_ref  : (1, C*H, W)  full input feature map for this batch element
    # ox/oy  : (1, 1, TN)   pixel-space sample coordinates for this (kk, ss)
    # ml     : (1, 1, TN)   mask logits
    # w_ref  : (1, OC, C)   1x1-conv weight slab for this kernel position kk
    # out    : (1, 1, OC, TN)
    # acc    : (OC, TN) f32 accumulator (scratch, persistent across kk)
    kk = pl.program_id(3)

    @pl.when(kk == 0)
    def _():
        acc_ref[...] = jnp.zeros_like(acc_ref)

    px = ox_ref[0]                      # (1, TN)
    py = oy_ref[0]                      # (1, TN)
    msk = jax.nn.sigmoid(ml_ref[0])     # (1, TN)  (EUP slot)

    x0f = jnp.floor(px)
    y0f = jnp.floor(py)
    fx = px - x0f
    fy = py - y0f
    x0 = x0f.astype(jnp.int32)
    y0 = y0f.astype(jnp.int32)

    TN = px.shape[-1]

    # Column one-hot Gx (W, TN).  Corners with cx < 0 or cx > W-1 never match
    # the iota range, so they contribute exactly zero (original OOB semantics).
    # Sigmoid modulation is folded into the two (1, TN) column weights.
    jj = lax.broadcasted_iota(jnp.int32, (W, TN), 0)
    gx = (jnp.where(jj == x0, (1.0 - fx) * msk, 0.0)
          + jnp.where(jj == x0 + 1, fx * msk, 0.0))

    # Row one-hot Gy (H, TN).
    ii = lax.broadcasted_iota(jnp.int32, (H, TN), 0)
    gy = (jnp.where(ii == y0, 1.0 - fy, 0.0)
          + jnp.where(ii == y0 + 1, fy, 0.0))

    # Gather columns on the MXU: (C*H, W) @ (W, TN) -> (C*H, TN).
    t = jnp.dot(x_ref[0].astype(jnp.bfloat16), gx.astype(jnp.bfloat16),
                preferred_element_type=jnp.float32)

    # Apply row weights and reduce over H: (C, H, TN) * (1, H, TN) -> (C, TN).
    sampled = jnp.sum(t.reshape(C, H, TN) * gy[None, :, :], axis=1)

    # Accumulate this kernel position's 1x1-conv contribution on the MXU.
    acc_ref[...] += jnp.dot(w_ref[0].astype(jnp.bfloat16),
                            sampled.astype(jnp.bfloat16),
                            preferred_element_type=jnp.float32)

    @pl.when(kk == pl.num_programs(3) - 1)
    def _():
        out_ref[0, 0] = acc_ref[...].astype(out_ref.dtype)


def _pick_tile(n_sp, C, H, W, OC, budget_bytes=12 * 1024 * 1024):
    """Largest spatial tile (lane count) whose per-step VMEM footprint fits."""
    cands = [m * 128 for m in range(n_sp // 128, 0, -1) if n_sp % (m * 128) == 0]
    if not cands:
        cands = [n_sp]                     # ragged spatial extent: single tile

    def est(tn):
        b = 3 * C * H * W * 4              # x block (double-buffered) + bf16 copy
        b += C * H * tn * 4                # (C*H, TN) gather intermediate
        b += (H + W) * tn * 4 + W * tn * 2 # gy + gx (+ bf16 gx)
        b += C * tn * 6                    # sampled f32 + bf16
        b += OC * tn * 12                  # accumulator + double-buffered out
        b += tn * 48                       # coordinate tiles (x3, double-buffered)
        return b

    for tn in cands:
        if est(tn) <= budget_bytes:
            return tn
    return cands[-1]


def fused_deform_conv(x, ox, oy, mlog, w_conv, *, K, S, Hoff, Woff, out_channels):
    """x: (B, C, h, w); ox/oy/mlog: (B, KK*SS*Hoff*Woff); w_conv: (OC, C*KK).

    Returns (B, SS, OC, Hoff*Woff) with ss = s0*S1 + s1.
    """
    B, C, h, w = x.shape
    KK = K[0] * K[1]
    SS = S[0] * S[1]
    OC = out_channels
    n_sp = Hoff * Woff

    TN = _pick_tile(n_sp, C, h, w, OC)
    nT = n_sp // TN

    x2d = x.reshape(B, C * h, w).astype(jnp.float32)
    ox_r = ox.reshape(B * KK * SS, 1, n_sp).astype(jnp.float32)
    oy_r = oy.reshape(B * KK * SS, 1, n_sp).astype(jnp.float32)
    ml_r = mlog.reshape(B * KK * SS, 1, n_sp).astype(jnp.float32)
    # w_conv channel index is c*KK + kk  ->  per-kk (OC, C) slabs.
    w_kk = jnp.transpose(w_conv.reshape(OC, C, KK), (2, 0, 1)).astype(jnp.float32)

    def coord_map(b, ss, n, kk):
        return (b * (KK * SS) + kk * SS + ss, 0, n)

    return pl.pallas_call(
        functools.partial(_fused_dcn_kernel, C=C, H=h, W=w),
        out_shape=jax.ShapeDtypeStruct((B, SS, OC, n_sp), jnp.float32),
        grid_spec=pltpu.PrefetchScalarGridSpec(
            num_scalar_prefetch=0,
            grid=(B, SS, nT, KK),
            in_specs=[
                pl.BlockSpec((1, C * h, w), lambda b, ss, n, kk: (b, 0, 0)),
                pl.BlockSpec((1, 1, TN), coord_map),
                pl.BlockSpec((1, 1, TN), coord_map),
                pl.BlockSpec((1, 1, TN), coord_map),
                pl.BlockSpec((1, OC, C), lambda b, ss, n, kk: (kk, 0, 0)),
            ],
            out_specs=pl.BlockSpec((1, 1, OC, TN),
                                   lambda b, ss, n, kk: (b, ss, 0, n)),
            scratch_shapes=[pltpu.VMEM((OC, TN), jnp.float32)],
        ),
        compiler_params=pltpu.CompilerParams(
            dimension_semantics=("parallel", "parallel", "parallel", "arbitrary"),
            vmem_limit_bytes=48 * 1024 * 1024),
    )(x2d, ox_r, oy_r, ml_r, w_kk)


# ---------------------------------------------------------------------------
# Module: parameter init + forward glue
# ---------------------------------------------------------------------------
def init_deform_trans_conv(key, in_channels, out_channels, kernel_size,
                           stride=1, padding=0, dilation=1, groups=1,
                           bias=False, mask=True):
    assert groups == 1  # TODO(synk): grouped 1x1 conv not implemented
    assert not bias     # TODO(synk): conv bias not implemented
    k = kernel_size
    K0 = K1 = k
    S0 = S1 = stride
    a = 3 if mask else 2
    off_out = a * K0 * K1 * S0 * S1
    k1, k2, k3 = jax.random.split(key, 3)
    # PyTorch zero-inits conv_offset; use small deterministic random weights so
    # the deformable sampling path is actually exercised.
    w_off = 0.1 * jax.random.normal(k1, (off_out, in_channels, k, k), jnp.float32)
    b_off = 0.1 * jax.random.normal(k2, (off_out,), jnp.float32)
    # TODO(synk): PyTorch uses orthogonal init (gain 1/sqrt(3)); Gaussian stand-in.
    w_conv = (1.0 / math.sqrt(3.0 * in_channels * K0 * K1)) * jax.random.normal(
        k3, (out_channels, in_channels * K0 * K1), jnp.float32)
    params = dict(w_off=w_off, b_off=b_off, w_conv=w_conv)
    cfg = dict(in_channels=in_channels, out_channels=out_channels,
               K=(K0, K1), S=(S0, S1), padding=(padding, padding),
               dilation=(dilation, dilation), groups=groups, mask=mask)
    return params, cfg


def _build_offsets(params, cfg, x):
    """conv_offset + coordinate grid construction (plain-JAX glue)."""
    B, C, h, w = x.shape
    K0, K1 = cfg["K"]
    S0, S1 = cfg["S"]
    pad0, pad1 = cfg["padding"]
    dil0, dil1 = cfg["dilation"]
    k = K0

    out = lax.conv_general_dilated(
        x, params["w_off"],
        window_strides=(1, 1),
        padding=[(k // 2, k // 2), (k // 2, k // 2)],
        rhs_dilation=(dil0, dil1),
        dimension_numbers=("NCHW", "OIHW", "NCHW"))
    out = out + params["b_off"][None, :, None, None]
    _, _, H, W = out.shape

    KK, SS = K0 * K1, S0 * S1
    N = KK * SS * H * W

    if cfg["mask"]:
        o1, o2, mlog = jnp.split(out, 3, axis=1)
    else:
        o1, o2 = jnp.split(out, 2, axis=1)
        mlog = jnp.full_like(o1, 1e9)  # sigmoid -> 1.0 (no modulation)

    x_start = dil1 / 2 * (K1 - 1) - pad1
    y_start = dil0 / 2 * (K0 - 1) - pad0
    x_cood = x_start + jnp.arange(W, dtype=jnp.float32)
    y_cood = y_start + jnp.arange(H, dtype=jnp.float32)

    xk = dil1 * (1 - K1) / 2 + dil1 * jnp.arange(K1, dtype=jnp.float32)
    yk = dil0 * (1 - K0) / 2 + dil0 * jnp.arange(K0, dtype=jnp.float32)
    x_bias = jnp.tile(xk, K0)           # (KK,)  'xy' meshgrid, row-major flatten
    y_bias = jnp.repeat(yk, K1)         # (KK,)
    xs = jnp.arange(S1, dtype=jnp.float32) / S1
    ys = jnp.arange(S0, dtype=jnp.float32) / S0
    x_sbias = jnp.tile(xs, S0)          # (SS,)
    y_sbias = jnp.repeat(ys, S1)        # (SS,)

    # offset_clamp is identity (offset_factor == 1)
    o1 = o1.reshape(B, KK, SS, H, W)
    o2 = o2.reshape(B, KK, SS, H, W)
    ox = (o1 + x_cood[None, None, None, None, :]
             + x_bias[None, :, None, None, None]
             + x_sbias[None, None, :, None, None]).reshape(B, N)
    oy = (o2 + y_cood[None, None, None, :, None]
             + y_bias[None, :, None, None, None]
             + y_sbias[None, None, :, None, None]).reshape(B, N)
    mlog = mlog.reshape(B, N)
    return ox, oy, mlog, (H, W, KK, SS, N)


def deform_trans_conv_forward(params, cfg, x):
    B, C, h, w = x.shape
    K0, K1 = cfg["K"]
    S0, S1 = cfg["S"]
    OC = cfg["out_channels"]
    ox, oy, mlog, (H, W, KK, SS, N) = _build_offsets(params, cfg, x)

    out = fused_deform_conv(x, ox, oy, mlog, params["w_conv"],
                            K=(K0, K1), S=(S0, S1), Hoff=H, Woff=W,
                            out_channels=OC)          # (B, SS, OC, H*W)

    # Final interleave of the stride positions (small output-sized transpose;
    # identity when stride == 1).
    out = out.reshape(B, S0, S1, OC, H, W)
    out = jnp.transpose(out, (0, 3, 4, 1, 5, 2))       # (B, OC, H, S0, W, S1)
    return out.reshape(B, OC, S0 * H, W * S1)


# ---------------------------------------------------------------------------
# Pure-JAX reference (gather-based bilinear) for correctness check
# ---------------------------------------------------------------------------
def _ref_grid_sample(x, ox, oy):
    B, C, h, w = x.shape
    N = ox.shape[1]
    x_flat = x.reshape(B, C, h * w)
    x0 = jnp.floor(ox)
    y0 = jnp.floor(oy)
    fx = ox - x0
    fy = oy - y0
    out = jnp.zeros((B, C, N), jnp.float32)
    for dx, dy, wgt in [(0.0, 0.0, (1 - fx) * (1 - fy)),
                        (1.0, 0.0, fx * (1 - fy)),
                        (0.0, 1.0, (1 - fx) * fy),
                        (1.0, 1.0, fx * fy)]:
        cx = x0 + dx
        cy = y0 + dy
        valid = (cx >= 0) & (cx <= w - 1) & (cy >= 0) & (cy <= h - 1)
        lin = (jnp.clip(cy, 0, h - 1) * w + jnp.clip(cx, 0, w - 1)).astype(jnp.int32)
        vals = jnp.take_along_axis(
            x_flat, jnp.broadcast_to(lin[:, None, :], (B, C, N)), axis=2)
        out = out + jnp.where(valid, wgt, 0.0)[:, None, :] * vals
    return out


def ref_forward(params, cfg, x):
    B, C, h, w = x.shape
    K0, K1 = cfg["K"]
    S0, S1 = cfg["S"]
    ox, oy, mlog, (H, W, KK, SS, N) = _build_offsets(params, cfg, x)
    sampled = _ref_grid_sample(x.astype(jnp.float32), ox, oy)
    sampled = sampled * jax.nn.sigmoid(mlog)[:, None, :]
    y = sampled.reshape(B, C, K0, K1, S0, S1, H, W)
    y = jnp.transpose(y, (0, 1, 2, 3, 6, 4, 7, 5))
    y = y.reshape(B, C * K0 * K1, S0 * H * W * S1)
    out = jnp.einsum("oc,bcp->bop", params["w_conv"], y)
    return out.reshape(B, cfg["out_channels"], S0 * H, W * S1)


if __name__ == "__main__":
    key = jax.random.PRNGKey(0)
    kx, kp = jax.random.split(key)
    B, C, Hin, Win = 2, 4, 16, 16
    x = jax.random.normal(kx, (B, C, Hin, Win), jnp.float32)

    params, cfg = init_deform_trans_conv(
        kp, in_channels=C, out_channels=8, kernel_size=3, stride=1,
        padding=1, dilation=1, groups=1, bias=False, mask=True)

    out = jax.block_until_ready(deform_trans_conv_forward(params, cfg, x))
    ref = jax.block_until_ready(ref_forward(params, cfg, x))

    assert out.shape == (B, 8, Hin, Win), out.shape
    # bf16 MXU operands (f32 accumulation) -> slightly looser tolerance than
    # a pure-f32 comparison.
    assert jnp.allclose(out, ref, rtol=2e-2, atol=2e-2), float(
        jnp.max(jnp.abs(out - ref)))
    print("KERNEL_OK")
</pallas_src>

<mosaic_0001>
module attributes {stable_mosaic.version = 11 : i64} {
  func.func @_fused_dcn_kernel(%arg0: i32, %arg1: i32, %arg2: i32, %arg3: i32, %arg4: memref<1x64x16xf32, #tpu.memory_space<vmem>>, %arg5: memref<1x1x256xf32, #tpu.memory_space<vmem>>, %arg6: memref<1x1x256xf32, #tpu.memory_space<vmem>>, %arg7: memref<1x1x256xf32, #tpu.memory_space<vmem>>, %arg8: memref<1x8x4xf32, #tpu.memory_space<vmem>>, %arg9: memref<1x1x8x256xf32, #tpu.memory_space<vmem>>, %arg10: memref<8x256xf32, #tpu.memory_space<vmem>>) attributes {dimension_semantics = [#tpu.dimension_semantics<parallel>, #tpu.dimension_semantics<parallel>, #tpu.dimension_semantics<parallel>, #tpu.dimension_semantics<arbitrary>], iteration_bounds = array<i64: 2, 1, 1, 9>, scalar_prefetch = 0 : i64, scratch_operands = 1 : i64, tpu.core_type = #tpu.core_type<tc>, window_params = [{transform_indices = @transform_0, window_bounds = array<i64: 1, 64, 16>}, {transform_indices = @transform_1, window_bounds = array<i64: 1, 1, 256>}, {transform_indices = @transform_2, window_bounds = array<i64: 1, 1, 256>}, {transform_indices = @transform_3, window_bounds = array<i64: 1, 1, 256>}, {transform_indices = @transform_4, window_bounds = array<i64: 1, 8, 4>}, {transform_indices = @transform_5, window_bounds = array<i64: 1, 1, 8, 256>}]} {
    %c0_i32 = arith.constant 0 : i32
    %0 = arith.cmpi eq, %arg3, %c0_i32 : i32
    %1 = arith.extui %0 : i1 to i32
    %c0_i32_0 = arith.constant 0 : i32
    %2 = arith.cmpi ne, %1, %c0_i32_0 : i32
    scf.if %2 {
      %cst_30 = arith.constant 0.000000e+00 : f32
      %79 = vector.broadcast %cst_30 : f32 to vector<8x256xf32>
      %c0_31 = arith.constant 0 : index
      %c0_32 = arith.constant 0 : index
      %80 = vector.load %arg10[%c0_31, %c0_32] : memref<8x256xf32, #tpu.memory_space<vmem>>, vector<8x256xf32>
      tpu.vector_store %arg10[%c0_31, %c0_32], %79 {strides = array<i32>} : memref<8x256xf32, #tpu.memory_space<vmem>>, vector<8x256xf32>,
    } else {
    }
    %c0 = arith.constant 0 : index
    %c0_1 = arith.constant 0 : index
    %c0_2 = arith.constant 0 : index
    %3 = vector.load %arg5[%c0, %c0_1, %c0_2] : memref<1x1x256xf32, #tpu.memory_space<vmem>>, vector<1x1x256xf32>
    %4 = vector.shape_cast %3 : vector<1x1x256xf32> to vector<1x256xf32>
    %c0_3 = arith.constant 0 : index
    %c0_4 = arith.constant 0 : index
    %c0_5 = arith.constant 0 : index
    %5 = vector.load %arg6[%c0_3, %c0_4, %c0_5] : memref<1x1x256xf32, #tpu.memory_space<vmem>>, vector<1x1x256xf32>
    %6 = vector.shape_cast %5 : vector<1x1x256xf32> to vector<1x256xf32>
    %c0_6 = arith.constant 0 : index
    %c0_7 = arith.constant 0 : index
    %c0_8 = arith.constant 0 : index
    %7 = vector.load %arg7[%c0_6, %c0_7, %c0_8] : memref<1x1x256xf32, #tpu.memory_space<vmem>>, vector<1x1x256xf32>
    %8 = vector.shape_cast %7 : vector<1x1x256xf32> to vector<1x256xf32>
    %9 = arith.negf %8 : vector<1x256xf32>
    %10 = math.exp %9 : vector<1x256xf32>
    %cst = arith.constant 1.000000e+00 : f32
    %11 = vector.broadcast %cst : f32 to vector<1x256xf32>
    %12 = arith.addf %11, %10 : vector<1x256xf32>
    %13 = arith.divf %11, %12 : vector<1x256xf32>
    %14 = math.floor %4 : vector<1x256xf32>
    %15 = math.floor %6 : vector<1x256xf32>
    %16 = arith.subf %4, %14 : vector<1x256xf32>
    %17 = arith.subf %6, %15 : vector<1x256xf32>
    %18 = arith.fptosi %14 : vector<1x256xf32> to vector<1x256xi32>
    %19 = arith.fptosi %15 : vector<1x256xf32> to vector<1x256xi32>
    %20 = tpu.iota {dimensions = array<i32: 0>} : vector<16x256xi32>
    %21 = vector.broadcast %18 : vector<1x256xi32> to vector<16x256xi32>
    %22 = arith.cmpi eq, %20, %21 : vector<16x256xi32>
    %cst_9 = arith.constant 1.000000e+00 : f32
    %23 = vector.broadcast %cst_9 : f32 to vector<1x256xf32>
    %24 = arith.subf %23, %16 : vector<1x256xf32>
    %25 = arith.mulf %24, %13 : vector<1x256xf32>
    %cst_10 = arith.constant 0.000000e+00 : f32
    %26 = vector.shape_cast %25 : vector<1x256xf32> to vector<1x256xf32>
    %27 = vector.broadcast %26 : vector<1x256xf32> to vector<16x256xf32>
    %28 = vector.broadcast %cst_10 : f32 to vector<16x256xf32>
    %29 = arith.select %22, %27, %28 : vector<16x256xi1>, vector<16x256xf32>
    %c1_i32 = arith.constant 1 : i32
    %30 = vector.broadcast %c1_i32 : i32 to vector<1x256xi32>
    %31 = arith.addi %18, %30 : vector<1x256xi32>
    %32 = vector.broadcast %31 : vector<1x256xi32> to vector<16x256xi32>
    %33 = arith.cmpi eq, %20, %32 : vector<16x256xi32>
    %34 = arith.mulf %16, %13 : vector<1x256xf32>
    %cst_11 = arith.constant 0.000000e+00 : f32
    %35 = vector.shape_cast %34 : vector<1x256xf32> to vector<1x256xf32>
    %36 = vector.broadcast %35 : vector<1x256xf32> to vector<16x256xf32>
    %37 = vector.broadcast %cst_11 : f32 to vector<16x256xf32>
    %38 = arith.select %33, %36, %37 : vector<16x256xi1>, vector<16x256xf32>
    %39 = arith.addf %29, %38 : vector<16x256xf32>
    %40 = tpu.iota {dimensions = array<i32: 0>} : vector<16x256xi32>
    %41 = vector.broadcast %19 : vector<1x256xi32> to vector<16x256xi32>
    %42 = arith.cmpi eq, %40, %41 : vector<16x256xi32>
    %cst_12 = arith.constant 1.000000e+00 : f32
    %43 = vector.broadcast %cst_12 : f32 to vector<1x256xf32>
    %44 = arith.subf %43, %17 : vector<1x256xf32>
    %cst_13 = arith.constant 0.000000e+00 : f32
    %45 = vector.shape_cast %44 : vector<1x256xf32> to vector<1x256xf32>
    %46 = vector.broadcast %45 : vector<1x256xf32> to vector<16x256xf32>
    %47 = vector.broadcast %cst_13 : f32 to vector<16x256xf32>
    %48 = arith.select %42, %46, %47 : vector<16x256xi1>, vector<16x256xf32>
    %c1_i32_14 = arith.constant 1 : i32
    %49 = vector.broadcast %c1_i32_14 : i32 to vector<1x256xi32>
    %50 = arith.addi %19, %49 : vector<1x256xi32>
    %51 = vector.broadcast %50 : vector<1x256xi32> to vector<16x256xi32>
    %52 = arith.cmpi eq, %40, %51 : vector<16x256xi32>
    %cst_15 = arith.constant 0.000000e+00 : f32
    %53 = vector.shape_cast %17 : vector<1x256xf32> to vector<1x256xf32>
    %54 = vector.broadcast %53 : vector<1x256xf32> to vector<16x256xf32>
    %55 = vector.broadcast %cst_15 : f32 to vector<16x256xf32>
    %56 = arith.select %52, %54, %55 : vector<16x256xi1>, vector<16x256xf32>
    %57 = arith.addf %48, %56 : vector<16x256xf32>
    %c0_16 = arith.constant 0 : index
    %c0_17 = arith.constant 0 : index
    %c0_18 = arith.constant 0 : index
    %58 = vector.load %arg4[%c0_16, %c0_17, %c0_18] : memref<1x64x16xf32, #tpu.memory_space<vmem>>, vector<1x64x16xf32>
    %59 = vector.shape_cast %58 : vector<1x64x16xf32> to vector<64x16xf32>
    %60 = arith.truncf %59 : vector<64x16xf32> to vector<64x16xbf16>
    %61 = arith.truncf %39 : vector<16x256xf32> to vector<16x256xbf16>
    %cst_19 = arith.constant dense<0.000000e+00> : vector<64x256xf32>
    %62 = tpu.matmul %60, %61, %cst_19 {dimension_numbers = #tpu.dot_dimension_numbers<[1], [0], [0], [1], [0, 0, 1, 1], [], []>} : vector<64x16xbf16>, vector<16x256xbf16>, vector<64x256xf32> -> vector<64x256xf32>
    %63 = vector.shape_cast %62 : vector<64x256xf32> to vector<4x16x256xf32>
    %64 = vector.shape_cast %57 : vector<16x256xf32> to vector<1x16x256xf32>
    %65 = vector.broadcast %64 : vector<1x16x256xf32> to vector<4x16x256xf32>
    %66 = arith.mulf %63, %65 : vector<4x16x256xf32>
    %cst_20 = arith.constant dense<0.000000e+00> : vector<4x256xf32>
    %67 = vector.multi_reduction <add>, %66, %cst_20 [1] : vector<4x16x256xf32> to vector<4x256xf32>
    %c0_21 = arith.constant 0 : index
    %c0_22 = arith.constant 0 : index
    %68 = vector.load %arg10[%c0_21, %c0_22] : memref<8x256xf32, #tpu.memory_space<vmem>>, vector<8x256xf32>
    %c0_23 = arith.constant 0 : index
    %c0_24 = arith.constant 0 : index
    %c0_25 = arith.constant 0 : index
    %69 = vector.load %arg8[%c0_23, %c0_24, %c0_25] : memref<1x8x4xf32, #tpu.memory_space<vmem>>, vector<1x8x4xf32>
    %70 = vector.shape_cast %69 : vector<1x8x4xf32> to vector<8x4xf32>
    %71 = arith.truncf %70 : vector<8x4xf32> to vector<8x4xbf16>
    %72 = arith.truncf %67 : vector<4x256xf32> to vector<4x256xbf16>
    %cst_26 = arith.constant dense<0.000000e+00> : vector<8x256xf32>
    %73 = tpu.matmul %71, %72, %cst_26 {dimension_numbers = #tpu.dot_dimension_numbers<[1], [0], [0], [1], [0, 0, 1, 1], [], []>} : vector<8x4xbf16>, vector<4x256xbf16>, vector<8x256xf32> -> vector<8x256xf32>
    %74 = arith.addf %68, %73 : vector<8x256xf32>
    %c0_27 = arith.constant 0 : index
    %c0_28 = arith.constant 0 : index
    %75 = vector.load %arg10[%c0_27, %c0_28] : memref<8x256xf32, #tpu.memory_space<vmem>>, vector<8x256xf32>
    tpu.vector_store %arg10[%c0_27, %c0_28], %74 {strides = array<i32>} : memref<8x256xf32, #tpu.memory_space<vmem>>, vector<8x256xf32>,
    %c8_i32 = arith.constant 8 : i32
    %76 = arith.cmpi eq, %arg3, %c8_i32 : i32
    %77 = arith.extui %76 : i1 to i32
    %c0_i32_29 = arith.constant 0 : i32
    %78 = arith.cmpi ne, %77, %c0_i32_29 : i32
    scf.if %78 {
      %c0_30 = arith.constant 0 : index
      %c0_31 = arith.constant 0 : index
      %79 = vector.load %arg10[%c0_30, %c0_31] : memref<8x256xf32, #tpu.memory_space<vmem>>, vector<8x256xf32>
      %c0_32 = arith.constant 0 : index
      %c0_33 = arith.constant 0 : index
      %c0_34 = arith.constant 0 : index
      %c0_35 = arith.constant 0 : index
      %80 = vector.load %arg9[%c0_32, %c0_33, %c0_34, %c0_35] : memref<1x1x8x256xf32, #tpu.memory_space<vmem>>, vector<1x1x8x256xf32>
      %81 = vector.shape_cast %80 : vector<1x1x8x256xf32> to vector<8x256xf32>
      %82 = vector.shape_cast %79 : vector<8x256xf32> to vector<1x1x8x256xf32>
      tpu.vector_store %arg9[%c0_32, %c0_33, %c0_34, %c0_35], %82 {strides = array<i32>} : memref<1x1x8x256xf32, #tpu.memory_space<vmem>>, vector<1x1x8x256xf32>,
    } else {
    }
    return
  }
  func.func @transform_0(%arg0: i32, %arg1: i32, %arg2: i32, %arg3: i32) -> (i32, i32, i32) {
    %c0_i32 = arith.constant 0 : i32
    %c0_i32_0 = arith.constant 0 : i32
    %c0_i32_1 = arith.constant 0 : i32
    return %arg0, %c0_i32, %c0_i32_0 : i32, i32, i32
  }
  func.func @transform_1(%arg0: i32, %arg1: i32, %arg2: i32, %arg3: i32) -> (i32, i32, i32) {
    %c9_i32 = arith.constant 9 : i32
    %0 = arith.muli %arg0, %c9_i32 : i32
    %c1_i32 = arith.constant 1 : i32
    %1 = arith.muli %arg3, %c1_i32 : i32
    %2 = arith.addi %0, %1 : i32
    %3 = arith.addi %2, %arg1 : i32
    %c0_i32 = arith.constant 0 : i32
    %c0_i32_0 = arith.constant 0 : i32
    return %3, %c0_i32, %arg2 : i32, i32, i32
  }
  func.func @transform_2(%arg0: i32, %arg1: i32, %arg2: i32, %arg3: i32) -> (i32, i32, i32) {
    %c9_i32 = arith.constant 9 : i32
    %0 = arith.muli %arg0, %c9_i32 : i32
    %c1_i32 = arith.constant 1 : i32
    %1 = arith.muli %arg3, %c1_i32 : i32
    %2 = arith.addi %0, %1 : i32
    %3 = arith.addi %2, %arg1 : i32
    %c0_i32 = arith.constant 0 : i32
    %c0_i32_0 = arith.constant 0 : i32
    return %3, %c0_i32, %arg2 : i32, i32, i32
  }
  func.func @transform_3(%arg0: i32, %arg1: i32, %arg2: i32, %arg3: i32) -> (i32, i32, i32) {
    %c9_i32 = arith.constant 9 : i32
    %0 = arith.muli %arg0, %c9_i32 : i32
    %c1_i32 = arith.constant 1 : i32
    %1 = arith.muli %arg3, %c1_i32 : i32
    %2 = arith.addi %0, %1 : i32
    %3 = arith.addi %2, %arg1 : i32
    %c0_i32 = arith.constant 0 : i32
    %c0_i32_0 = arith.constant 0 : i32
    return %3, %c0_i32, %arg2 : i32, i32, i32
  }
  func.func @transform_4(%arg0: i32, %arg1: i32, %arg2: i32, %arg3: i32) -> (i32, i32, i32) {
    %c0_i32 = arith.constant 0 : i32
    %c0_i32_0 = arith.constant 0 : i32
    %c0_i32_1 = arith.constant 0 : i32
    return %arg3, %c0_i32, %c0_i32_0 : i32, i32, i32
  }
  func.func @transform_5(%arg0: i32, %arg1: i32, %arg2: i32, %arg3: i32) -> (i32, i32, i32, i32) {
    %c0_i32 = arith.constant 0 : i32
    %c0_i32_0 = arith.constant 0 : i32
    return %arg0, %arg1, %c0_i32, %arg2 : i32, i32, i32, i32
  }
}

</mosaic_0001>

<llo_original>
// kernel: tpu_custom_call.1
$region0: #{tpu_custom_call.1}
  #allocation0 [shape = 'u32[]', space=smem, size = 0x4, offset = 0x4, fixed_abs, tag = 'smem constant byte address 0x4 - core index']
  #allocation1 [shape = 'u32[144,128]{1,0:T(1,128)}', space=vmem, size = 0x12000, scoped, tag = 'internal scratch']
  #allocation2 [shape = 'f32[8,256]{1,0:T(8,128)}', space=vmem, size = 0x2000, scoped, tag = 'scratch operand']
  %s0 = inlined_call_operand.vmem [shape: f32[2,64,16], index: 0, kind: input, shape index: {}]
  %s1 = inlined_call_operand.vmem [shape: f32[18,1,256], index: 1, kind: input, shape index: {}]
  %s2 = inlined_call_operand.vmem [shape: f32[18,1,256], index: 2, kind: input, shape index: {}]
  %s3 = inlined_call_operand.vmem [shape: f32[18,1,256], index: 3, kind: input, shape index: {}]
  %s4 = inlined_call_operand.vmem [shape: f32[9,8,4], index: 4, kind: input, shape index: {}]
  %s5 = inlined_call_operand.hbm [shape: f32[2,1,8,256], index: 5, kind: output, shape index: {}]
  %s6 = sld [smem:[#allocation0]]
  $region61: #{tpu_custom_call.1} parent=0
    _
  %s8 = ssub.s32 1, %s6
  %s9 = scalar_select 0, %s8, %s6
  $region1: #{tpu_custom_call.1} parent=0
    #allocation3 [shape = 'u8[16384]{0}', space=vmem, size = 0x4000, scoped, tag = 'output window, operand 0']
    #allocation4 [shape = 's32[2]{0}', space=sflag, size = 0x8, scoped, tag = 'scoped memory for tpu_custom_call.1']
    %10 = vsyncpa [#allocation4], 0
    %s11 = scalar_lea.sflag [#allocation4], 1
    %12 = vsyncpa %s11, 0
    loop: start=0, step=1, limit=20
    $region2: #{tpu_custom_call.1} parent=1 // loop_pre_header
      _
    $region3: #{tpu_custom_call.1} parent=1 // loop_header
      %s14 = sphi 0, %s18
      %p15 = scmp.ge.s32.totalorder %s14, 20
      %s21 = sphi 0, %s47
      %s22 = sphi 0, %s43
      %s23 = sphi 0, %s39
      %s24 = sphi 0, %s35
      %s25 = sphi 0, %s21
      %s26 = sphi 0, %s22
      %s27 = sphi 0, %s23
      %s28 = sphi 0, %s24
      %s29 = sphi 0, %s25
      %s30 = sphi 0, %s26
      %s31 = sphi 0, %s27
      %s32 = sphi 0, %s28
      %s50 = sphi 0, %s52
      %s53 = sphi 0, %s50
      %s54 = sphi 0, %s53
      %s70 = sphi 0, %s54
      %s84 = sphi 0, %s86
      %s87 = sphi 0, %s84
      %s88 = sphi 0, %s87
      %s104 = sphi 0, %s88
      %s118 = sphi 0, %s120
      %s121 = sphi 0, %s118
      %s122 = sphi 0, %s121
      %s138 = sphi 0, %s122
      %s152 = sphi 0, %s154
      %s155 = sphi 0, %s152
      %s156 = sphi 0, %s155
      %s172 = sphi 0, %s156
      %s178 = sphi 0, %s180
      %s181 = sphi 0, %s178
      %s182 = sphi 0, %s181
      %s198 = sphi 0, %s182
      %s208 = sphi 0, %s210
      %s211 = sphi 0, %s208
      %s212 = sphi 0, %s211
      %s228 = sphi 0, %s212
    $region4: #{tpu_custom_call.1} parent=1 // loop_header_branch
      %17 = sbr.rel (%p15) target = $region8
    $region5: #{tpu_custom_call.1} parent=1 // loop_body
      %s19 = ssub.s32 %s14, 1
      %s20 = ssub.s32 %s14, 2
      %s33 = sadd.s32 1, %s24
      %p34 = scmp.ge.s32.totalorder %s33, 9
      %s35 = scalar_select %p34, 0, %s33
      %s36 = sadd.s32 1, %s23
      %s37 = scalar_select %p34, %s36, %s23
      %p38 = scmp.ge.s32.totalorder %s37, 1
      %s39 = scalar_select %p38, 0, %s37
      %s40 = sadd.s32 1, %s22
      %s41 = scalar_select %p38, %s40, %s22
      %p42 = scmp.ge.s32.totalorder %s41, 1
      %s43 = scalar_select %p42, 0, %s41
      %s44 = sadd.s32 1, %s21
      %s45 = scalar_select %p42, %s44, %s21
      %p46 = scmp.ge.s32.totalorder %s45, 2
      %s47 = scalar_select %p46, 0, %s45
      %s48 = ssub.s32 %s21, %s47
      %p49 = scmp.eq.s32.totalorder %s48, 0
      %s51 = sadd.s32 %s50, 1
      %s52 = scalar_select %p49, %s50, %s51
      %p55 = pneg %p49
      %p56 = scmp.eq.s32.totalorder %s14, 17
      %p57 = por %p55, %p56
      %p58 = scmp.ne.s32.totalorder %s50, %s53
      %p59 = scmp.eq.s32.totalorder %s14, 0
      %p60 = por %p58, %p59
      %p61 = scmp.ne.s32.totalorder %s50, %s53
      %p62 = scmp.eq.s32.totalorder %s19, 17
      %p63 = por %p61, %p62
      %p64 = scmp.ne.s32.totalorder %s53, %s54
      %p65 = scmp.eq.s32.totalorder %s19, 0
      %p66 = por %p64, %p65
      %p67 = scmp.ne.s32.totalorder %s53, %s54
      %p68 = scmp.eq.s32.totalorder %s20, 17
      %p69 = por %p67, %p68
      %p71 = scmp.ne.s32.totalorder %s54, %s70
      %p72 = scmp.eq.s32.totalorder %s20, 0
      %p73 = por %p71, %p72
      %s74 = smul.u32 %s21, 9
      %s75 = sadd.s32 %s74, %s24
      %s76 = sadd.s32 %s75, %s22
      %s77 = smul.u32 %s47, 9
      %s78 = sadd.s32 %s77, %s35
      %s79 = sadd.s32 %s78, %s43
      %s80 = ssub.s32 %s76, %s79
      %s81 = ssub.s32 %s23, %s39
      %s82 = sor.u32 %s80, %s81
      %p83 = scmp.eq.s32.totalorder %s82, 0
      %s85 = sadd.s32 %s84, 1
      %s86 = scalar_select %p83, %s84, %s85
      %p89 = pneg %p83
      %p90 = scmp.eq.s32.totalorder %s14, 17
      %p91 = por %p89, %p90
      %p92 = scmp.ne.s32.totalorder %s84, %s87
      %p93 = scmp.eq.s32.totalorder %s14, 0
      %p94 = por %p92, %p93
      %p95 = scmp.ne.s32.totalorder %s84, %s87
      %p96 = scmp.eq.s32.totalorder %s19, 17
      %p97 = por %p95, %p96
      %p98 = scmp.ne.s32.totalorder %s87, %s88
      %p99 = scmp.eq.s32.totalorder %s19, 0
      %p100 = por %p98, %p99
      %p101 = scmp.ne.s32.totalorder %s87, %s88
      %p102 = scmp.eq.s32.totalorder %s20, 17
      %p103 = por %p101, %p102
      %p105 = scmp.ne.s32.totalorder %s88, %s104
      %p106 = scmp.eq.s32.totalorder %s20, 0
      %p107 = por %p105, %p106
      %s108 = smul.u32 %s21, 9
      %s109 = sadd.s32 %s108, %s24
      %s110 = sadd.s32 %s109, %s22
      %s111 = smul.u32 %s47, 9
      %s112 = sadd.s32 %s111, %s35
      %s113 = sadd.s32 %s112, %s43
      %s114 = ssub.s32 %s110, %s113
      %s115 = ssub.s32 %s23, %s39
      %s116 = sor.u32 %s114, %s115
      %p117 = scmp.eq.s32.totalorder %s116, 0
      %s119 = sadd.s32 %s118, 1
      %s120 = scalar_select %p117, %s118, %s119
      %p123 = pneg %p117
      %p124 = scmp.eq.s32.totalorder %s14, 17
      %p125 = por %p123, %p124
      %p126 = scmp.ne.s32.totalorder %s118, %s121
      %p127 = scmp.eq.s32.totalorder %s14, 0
      %p128 = por %p126, %p127
      %p129 = scmp.ne.s32.totalorder %s118, %s121
      %p130 = scmp.eq.s32.totalorder %s19, 17
      %p131 = por %p129, %p130
      %p132 = scmp.ne.s32.totalorder %s121, %s122
      %p133 = scmp.eq.s32.totalorder %s19, 0
      %p134 = por %p132, %p133
      %p135 = scmp.ne.s32.totalorder %s121, %s122
      %p136 = scmp.eq.s32.totalorder %s20, 17
      %p137 = por %p135, %p136
      %p139 = scmp.ne.s32.totalorder %s122, %s138
      %p140 = scmp.eq.s32.totalorder %s20, 0
      %p141 = por %p139, %p140
      %s142 = smul.u32 %s21, 9
      %s143 = sadd.s32 %s142, %s24
      %s144 = sadd.s32 %s143, %s22
      %s145 = smul.u32 %s47, 9
      %s146 = sadd.s32 %s145, %s35
      %s147 = sadd.s32 %s146, %s43
      %s148 = ssub.s32 %s144, %s147
      %s149 = ssub.s32 %s23, %s39
      %s150 = sor.u32 %s148, %s149
      %p151 = scmp.eq.s32.totalorder %s150, 0
      %s153 = sadd.s32 %s152, 1
      %s154 = scalar_select %p151, %s152, %s153
      %p157 = pneg %p151
      %p158 = scmp.eq.s32.totalorder %s14, 17
      %p159 = por %p157, %p158
      %p160 = scmp.ne.s32.totalorder %s152, %s155
      %p161 = scmp.eq.s32.totalorder %s14, 0
      %p162 = por %p160, %p161
      %p163 = scmp.ne.s32.totalorder %s152, %s155
      %p164 = scmp.eq.s32.totalorder %s19, 17
      %p165 = por %p163, %p164
      %p166 = scmp.ne.s32.totalorder %s155, %s156
      %p167 = scmp.eq.s32.totalorder %s19, 0
      %p168 = por %p166, %p167
      %p169 = scmp.ne.s32.totalorder %s155, %s156
      %p170 = scmp.eq.s32.totalorder %s20, 17
      %p171 = por %p169, %p170
      %p173 = scmp.ne.s32.totalorder %s156, %s172
      %p174 = scmp.eq.s32.totalorder %s20, 0
      %p175 = por %p173, %p174
      %s176 = ssub.s32 %s24, %s35
      %p177 = scmp.eq.s32.totalorder %s176, 0
      %s179 = sadd.s32 %s178, 1
      %s180 = scalar_select %p177, %s178, %s179
      %p183 = pneg %p177
      %p184 = scmp.eq.s32.totalorder %s14, 17
      %p185 = por %p183, %p184
      %p186 = scmp.ne.s32.totalorder %s178, %s181
      %p187 = scmp.eq.s32.totalorder %s14, 0
      %p188 = por %p186, %p187
      %p189 = scmp.ne.s32.totalorder %s178, %s181
      %p190 = scmp.eq.s32.totalorder %s19, 17
      %p191 = por %p189, %p190
      %p192 = scmp.ne.s32.totalorder %s181, %s182
      %p193 = scmp.eq.s32.totalorder %s19, 0
      %p194 = por %p192, %p193
      %p195 = scmp.ne.s32.totalorder %s181, %s182
      %p196 = scmp.eq.s32.totalorder %s20, 17
      %p197 = por %p195, %p196
      %p199 = scmp.ne.s32.totalorder %s182, %s198
      %p200 = scmp.eq.s32.totalorder %s20, 0
      %p201 = por %p199, %p200
      %s202 = ssub.s32 %s21, %s47
      %s203 = ssub.s32 %s22, %s43
      %s204 = sor.u32 %s202, %s203
      %s205 = ssub.s32 %s23, %s39
      %s206 = sor.u32 %s204, %s205
      %p207 = scmp.eq.s32.totalorder %s206, 0
      %s209 = sadd.s32 %s208, 1
      %s210 = scalar_select %p207, %s208, %s209
      %p213 = pneg %p207
      %p214 = scmp.eq.s32.totalorder %s14, 17
      %p215 = por %p213, %p214
      %p216 = scmp.ne.s32.totalorder %s208, %s211
      %p217 = scmp.eq.s32.totalorder %s14, 0
      %p218 = por %p216, %p217
      %p219 = scmp.ne.s32.totalorder %s208, %s211
      %p220 = scmp.eq.s32.totalorder %s19, 17
      %p221 = por %p219, %p220
      %p222 = scmp.ne.s32.totalorder %s211, %s212
      %p223 = scmp.eq.s32.totalorder %s19, 0
      %p224 = por %p222, %p223
      %p225 = scmp.ne.s32.totalorder %s211, %s212
      %p226 = scmp.eq.s32.totalorder %s20, 17
      %p227 = por %p225, %p226
      %p229 = scmp.ne.s32.totalorder %s212, %s228
      %p230 = scmp.eq.s32.totalorder %s20, 0
      %p231 = por %p229, %p230
      %p232 = scmp.le.s32.totalorder 1, %s14
      %p233 = scmp.lt.s32.totalorder %s14, 19
      %p234 = pnand %p232, %p233
      %p235 = pneg %p234
      // Predicated region
      $region9: #{tpu_custom_call.1} parent=5 // pred_check
        _
      $region10: #{tpu_custom_call.1} parent=5 // pred_check_branch
        %237 = sbr.rel (%p234) target = $region12
      $region11: #{tpu_custom_call.1} parent=5 // pred_region
        %s238 = ssub.s32 %s14, 1
      $region12: #{tpu_custom_call.1} parent=5 // pred_fallthru
        _
      %p239 = scmp.lt.s32.totalorder %s14, 18
      // Predicated region
      $region13: #{tpu_custom_call.1} parent=5 // pred_check
        %p240 = pneg %p239
      $region14: #{tpu_custom_call.1} parent=5 // pred_check_branch
        %242 = sbr.rel (%p240) target = $region16
      $region15: #{tpu_custom_call.1} parent=5 // pred_region
        // Predicated region
        $region17: #{tpu_custom_call.1} parent=15 // pred_check
          %p243 = pneg %p60
        $region18: #{tpu_custom_call.1} parent=15 // pred_check_branch
          %245 = sbr.rel (%p243) target = $region20
        $region19: #{tpu_custom_call.1} parent=15 // pred_region
          %p246 = scmp.lt.s32.totalorder %s21, 1
          %s247 = scalar_select %p246, %s21, 1
          %s248 = smul.addr %s247, 8
          %s249 = smul.addr %s248, 8
          %s250 = scalar_lea.vmem %s0, %s249
        $region20: #{tpu_custom_call.1} parent=15 // pred_fallthru
          _
        // Predicated region
        $region21: #{tpu_custom_call.1} parent=15 // pred_check
          %p251 = pneg %p94
        $region22: #{tpu_custom_call.1} parent=15 // pred_check_branch
          %253 = sbr.rel (%p251) target = $region24
        $region23: #{tpu_custom_call.1} parent=15 // pred_region
          %s254 = smul.u32 %s21, 9
          %s255 = sadd.s32 %s254, %s24
          %s256 = sadd.s32 %s255, %s22
          %s257 = smul.u32 2, %s23
          %p258 = scmp.lt.s32.totalorder %s256, 17
          %s259 = scalar_select %p258, %s256, 17
          %p260 = scmp.lt.s32.totalorder %s257, 1
          %s261 = scalar_select %p260, %s257, 1
          %s262 = smul.addr %s259, 2
          %s263 = sadd.s32 %s261, %s262
          %s264 = scalar_lea.vmem %s1, %s263
          %s265 = smul.u32 %s21, 9
          %s266 = sadd.s32 %s265, %s24
          %s267 = sadd.s32 %s266, %s22
          %s268 = smul.u32 2, %s23
        $region24: #{tpu_custom_call.1} parent=15 // pred_fallthru
          _
        // Predicated region
        $region25: #{tpu_custom_call.1} parent=15 // pred_check
          %p269 = pneg %p128
        $region26: #{tpu_custom_call.1} parent=15 // pred_check_branch
          %271 = sbr.rel (%p269) target = $region28
        $region27: #{tpu_custom_call.1} parent=15 // pred_region
          %s272 = smul.u32 %s21, 9
          %s273 = sadd.s32 %s272, %s24
          %s274 = sadd.s32 %s273, %s22
          %s275 = smul.u32 2, %s23
          %p276 = scmp.lt.s32.totalorder %s274, 17
          %s277 = scalar_select %p276, %s274, 17
          %p278 = scmp.lt.s32.totalorder %s275, 1
          %s279 = scalar_select %p278, %s275, 1
          %s280 = smul.addr %s277, 2
          %s281 = sadd.s32 %s279, %s280
          %s282 = scalar_lea.vmem %s2, %s281
          %s283 = smul.u32 %s21, 9
          %s284 = sadd.s32 %s283, %s24
          %s285 = sadd.s32 %s284, %s22
          %s286 = smul.u32 2, %s23
        $region28: #{tpu_custom_call.1} parent=15 // pred_fallthru
          _
        // Predicated region
        $region29: #{tpu_custom_call.1} parent=15 // pred_check
          %p287 = pneg %p162
        $region30: #{tpu_custom_call.1} parent=15 // pred_check_branch
          %289 = sbr.rel (%p287) target = $region32
        $region31: #{tpu_custom_call.1} parent=15 // pred_region
          %s290 = smul.u32 %s21, 9
          %s291 = sadd.s32 %s290, %s24
          %s292 = sadd.s32 %s291, %s22
          %s293 = smul.u32 2, %s23
          %p294 = scmp.lt.s32.totalorder %s292, 17
          %s295 = scalar_select %p294, %s292, 17
          %p296 = scmp.lt.s32.totalorder %s293, 1
          %s297 = scalar_select %p296, %s293, 1
          %s298 = smul.addr %s295, 2
          %s299 = sadd.s32 %s297, %s298
          %s300 = scalar_lea.vmem %s3, %s299
          %s301 = smul.u32 %s21, 9
          %s302 = sadd.s32 %s301, %s24
          %s303 = sadd.s32 %s302, %s22
          %s304 = smul.u32 2, %s23
        $region32: #{tpu_custom_call.1} parent=15 // pred_fallthru
          _
        // Predicated region
        $region33: #{tpu_custom_call.1} parent=15 // pred_check
          %p305 = pneg %p188
        $region34: #{tpu_custom_call.1} parent=15 // pred_check_branch
          %307 = sbr.rel (%p305) target = $region36
        $region35: #{tpu_custom_call.1} parent=15 // pred_region
          %p308 = scmp.lt.s32.totalorder %s24, 8
          %s309 = scalar_select %p308, %s24, 8
          %s310 = smul.addr %s309, 8
          %s311 = scalar_lea.vmem %s4, %s310
        $region36: #{tpu_custom_call.1} parent=15 // pred_fallthru
          _
      $region16: #{tpu_custom_call.1} parent=5 // pred_fallthru
        _
      %p312 = scmp.le.s32.totalorder 1, %s14
      %p313 = scmp.lt.s32.totalorder %s14, 19
      %p314 = pnand %p312, %p313
      %p315 = pneg %p314
      // Predicated region
      $region37: #{tpu_custom_call.1} parent=5 // pred_check
        _
      $region38: #{tpu_custom_call.1} parent=5 // pred_check_branch
        %317 = sbr.rel (%p314) target = $region40
      $region39: #{tpu_custom_call.1} parent=5 // pred_region
        %s318 = ssub.s32 %s14, 1
        %p319 = scmp.lt.s32.totalorder %s25, 1
        %s320 = scalar_select %p319, %s25, 1
        %s321 = smul.addr %s320, 8
        %s322 = smul.addr %s321, 8
        %s323 = scalar_lea.vmem %s0, %s322
        %p324 = pneg %p66
        %p325 = pneg %p63
        %s326 = smul.u32 %s25, 9
        %s327 = sadd.s32 %s326, %s28
        %s328 = sadd.s32 %s327, %s26
        %s329 = smul.u32 2, %s27
        %p330 = scmp.lt.s32.totalorder %s328, 17
        %s331 = scalar_select %p330, %s328, 17
        %p332 = scmp.lt.s32.totalorder %s329, 1
        %s333 = scalar_select %p332, %s329, 1
        %s334 = smul.addr %s331, 2
        %s335 = sadd.s32 %s333, %s334
        %s336 = scalar_lea.vmem %s1, %s335
        %p337 = pneg %p100
        %p338 = pneg %p97
        %s339 = smul.u32 %s25, 9
        %s340 = sadd.s32 %s339, %s28
        %s341 = sadd.s32 %s340, %s26
        %s342 = smul.u32 2, %s27
        %p343 = scmp.lt.s32.totalorder %s341, 17
        %s344 = scalar_select %p343, %s341, 17
        %p345 = scmp.lt.s32.totalorder %s342, 1
        %s346 = scalar_select %p345, %s342, 1
        %s347 = smul.addr %s344, 2
        %s348 = sadd.s32 %s346, %s347
        %s349 = scalar_lea.vmem %s2, %s348
        %p350 = pneg %p134
        %p351 = pneg %p131
        %s352 = smul.u32 %s25, 9
        %s353 = sadd.s32 %s352, %s28
        %s354 = sadd.s32 %s353, %s26
        %s355 = smul.u32 2, %s27
        %p356 = scmp.lt.s32.totalorder %s354, 17
        %s357 = scalar_select %p356, %s354, 17
        %p358 = scmp.lt.s32.totalorder %s355, 1
        %s359 = scalar_select %p358, %s355, 1
        %s360 = smul.addr %s357, 2
        %s361 = sadd.s32 %s359, %s360
        %s362 = scalar_lea.vmem %s3, %s361
        %p363 = pneg %p168
        %p364 = pneg %p165
        %p365 = scmp.lt.s32.totalorder %s28, 8
        %s366 = scalar_select %p365, %s28, 8
        %s367 = smul.addr %s366, 8
        %s368 = scalar_lea.vmem %s4, %s367
        %p369 = pneg %p194
        %p370 = pneg %p191
        %p371 = pneg %p224
        %p372 = pneg %p221
        %s373 = sand.u32 %s211, 1
        %s374 = scalar_lea.sflag [#allocation4], %s373
        %s375 = sand.u32 %s211, 1
        %s376 = smul.addr %s375, 16
        %s377 = scalar_lea.vmem [#allocation3], %s376
        %p378 = scmp.lt.s32.totalorder %s25, 1
        %s379 = scalar_select %p378, %s25, 1
        %s380 = smul.addr %s379, 8
        %s381 = smul.addr %s380, 8
        %s382 = scalar_lea.vmem %s0, %s381
        %s383 = smul.u32 %s25, 9
        %s384 = sadd.s32 %s383, %s28
        %s385 = sadd.s32 %s384, %s26
        %s386 = smul.u32 2, %s27
        %p387 = scmp.lt.s32.totalorder %s385, 17
        %s388 = scalar_select %p387, %s385, 17
        %p389 = scmp.lt.s32.totalorder %s386, 1
        %s390 = scalar_select %p389, %s386, 1
        %s391 = smul.addr %s388, 2
        %s392 = sadd.s32 %s390, %s391
        %s393 = scalar_lea.vmem %s1, %s392
        %s394 = smul.u32 %s25, 9
        %s395 = sadd.s32 %s394, %s28
        %s396 = sadd.s32 %s395, %s26
        %s397 = smul.u32 2, %s27
        %s398 = smul.u32 %s25, 9
        %s399 = sadd.s32 %s398, %s28
        %s400 = sadd.s32 %s399, %s26
        %s401 = smul.u32 2, %s27
        %p402 = scmp.lt.s32.totalorder %s400, 17
        %s403 = scalar_select %p402, %s400, 17
        %p404 = scmp.lt.s32.totalorder %s401, 1
        %s405 = scalar_select %p404, %s401, 1
        %s406 = smul.addr %s403, 2
        %s407 = sadd.s32 %s405, %s406
        %s408 = scalar_lea.vmem %s2, %s407
        %s409 = smul.u32 %s25, 9
        %s410 = sadd.s32 %s409, %s28
        %s411 = sadd.s32 %s410, %s26
        %s412 = smul.u32 2, %s27
        %s413 = smul.u32 %s25, 9
        %s414 = sadd.s32 %s413, %s28
        %s415 = sadd.s32 %s414, %s26
        %s416 = smul.u32 2, %s27
        %p417 = scmp.lt.s32.totalorder %s415, 17
        %s418 = scalar_select %p417, %s415, 17
        %p419 = scmp.lt.s32.totalorder %s416, 1
        %s420 = scalar_select %p419, %s416, 1
        %s421 = smul.addr %s418, 2
        %s422 = sadd.s32 %s420, %s421
        %s423 = scalar_lea.vmem %s3, %s422
        %s424 = smul.u32 %s25, 9
        %s425 = sadd.s32 %s424, %s28
        %s426 = sadd.s32 %s425, %s26
        %s427 = smul.u32 2, %s27
        %p428 = scmp.lt.s32.totalorder %s28, 8
        %s429 = scalar_select %p428, %s28, 8
        %s430 = smul.addr %s429, 8
        %s431 = scalar_lea.vmem %s4, %s430
        %s432 = smul.u32 2, %s27
        %p434 = scmp.eq.s32.totalorder %s28, 0
        // Predicated region
        $region41: #{tpu_custom_call.1} parent=39 // pred_check
          %p435 = pneg %p434
        $region42: #{tpu_custom_call.1} parent=39 // pred_check_branch
          %437 = sbr.rel (%p435) target = $region44
        $region43: #{tpu_custom_call.1} parent=39 // pred_region
          %438 = vst [vmem:[#allocation2] sm:$0xff] 0.0
          %439 = vst [vmem:[#allocation2 + $0x8] sm:$0xff] 0.0
        $region44: #{tpu_custom_call.1} parent=39 // pred_fallthru
          _
        %v440 = vld [vmem:[%s393] sm:$0x3]
        %v441 = vld [vmem:[%s408] sm:$0x3]
        %v442 = vld [vmem:[%s423] sm:$0x3]
        %v443 = vxor.u32 %v442, 2147483648
        %v444 = vmul.f32 %v443, 1.442695
        %v445 = vpow.pop %v444
        %v446 = vadd.f32 %v445, 1.0
        %v447 = vrcp.pop %v446
        %v448 = vmul.f32 1.0, %v447
        %v449 = vfloor.f32 %v440
        %v450 = vfloor.f32 %v441
        %v451 = vsub.f32 %v440, %v449
        %v452 = vsub.f32 %v441, %v450
        %v453 = vcvt.f32.s32.to.zero.pseudo %v449
        %v454 = vcvt.f32.s32.to.zero.pseudo %v450
        %v455 = vlaneseq
        %v456 = vshrl.u32 %v455, 7
        %v457 = vadd.s32 %v456, 8
        %v458 = vlaneseq
        %v459 = vshrl.u32 %v458, 7
        %v460 = vsub.s32 0, %v459
        %v461 = vrot.slane %v453, %v460
        %v462 = vlaneseq
        %v463 = vshrl.u32 %v462, 7
        %v464 = vsub.s32 1, %v463
        %v465 = vrot.slane %v453, %v464
        %vm466 = vcmp.eq.s32.totalorder %v456, %v461
        %vm467 = vcmp.eq.s32.totalorder %v456, %v465
        %vm468 = vcmp.eq.s32.totalorder %v457, %v461
        %vm469 = vcmp.eq.s32.totalorder %v457, %v465
        %v470 = vsub.f32 1.0, %v451
        %v471 = vmul.f32 %v470, %v448
        %v473 = vlaneseq
        %v474 = vshrl.u32 %v473, 7
        %v475 = vsub.s32 0, %v474
        %v476 = vrot.slane %v471, %v475
        %v477 = vlaneseq
        %v478 = vshrl.u32 %v477, 7
        %v479 = vsub.s32 1, %v478
        %v480 = vrot.slane %v471, %v479
        %v483 = vsel %vm466, %v476, 0.0
        %v484 = vsel %vm467, %v480, 0.0
        %v485 = vsel %vm468, %v476, 0.0
        %v486 = vsel %vm469, %v480, 0.0
        %v487 = vadd.s32 %v453, 1
        %v488 = vlaneseq
        %v489 = vshrl.u32 %v488, 7
        %v490 = vsub.s32 0, %v489
        %v491 = vrot.slane %v487, %v490
        %v492 = vlaneseq
        %v493 = vshrl.u32 %v492, 7
        %v494 = vsub.s32 1, %v493
        %v495 = vrot.slane %v487, %v494
        %vm496 = vcmp.eq.s32.totalorder %v456, %v491
        %vm497 = vcmp.eq.s32.totalorder %v456, %v495
        %vm498 = vcmp.eq.s32.totalorder %v457, %v491
        %vm499 = vcmp.eq.s32.totalorder %v457, %v495
        %v500 = vmul.f32 %v451, %v448
        %v502 = vlaneseq
        %v503 = vshrl.u32 %v502, 7
        %v504 = vsub.s32 0, %v503
        %v505 = vrot.slane %v500, %v504
        %v506 = vlaneseq
        %v507 = vshrl.u32 %v506, 7
        %v508 = vsub.s32 1, %v507
        %v509 = vrot.slane %v500, %v508
        %v512 = vsel %vm496, %v505, 0.0
        %v513 = vsel %vm497, %v509, 0.0
        %v514 = vsel %vm498, %v505, 0.0
        %v515 = vsel %vm499, %v509, 0.0
        %v516 = vadd.f32 %v483, %v512
        %v517 = vadd.f32 %v484, %v513
        %v518 = vadd.f32 %v485, %v514
        %v519 = vadd.f32 %v486, %v515
        %v520 = vlaneseq
        %v521 = vshrl.u32 %v520, 7
        %v522 = vsub.s32 0, %v521
        %v523 = vrot.slane %v454, %v522
        %v524 = vlaneseq
        %v525 = vshrl.u32 %v524, 7
        %v526 = vsub.s32 1, %v525
        %v527 = vrot.slane %v454, %v526
        %vm528 = vcmp.eq.s32.totalorder %v456, %v523
        %vm529 = vcmp.eq.s32.totalorder %v456, %v527
        %vm530 = vcmp.eq.s32.totalorder %v457, %v523
        %vm531 = vcmp.eq.s32.totalorder %v457, %v527
        %v532 = vsub.f32 1.0, %v452
        %v534 = vlaneseq
        %v535 = vshrl.u32 %v534, 7
        %v536 = vsub.s32 0, %v535
        %v537 = vrot.slane %v532, %v536
        %v538 = vlaneseq
        %v539 = vshrl.u32 %v538, 7
        %v540 = vsub.s32 1, %v539
        %v541 = vrot.slane %v532, %v540
        %v544 = vsel %vm528, %v537, 0.0
        %v545 = vsel %vm529, %v541, 0.0
        %v546 = vsel %vm530, %v537, 0.0
        %v547 = vsel %vm531, %v541, 0.0
        %v548 = vadd.s32 %v454, 1
        %v549 = vlaneseq
        %v550 = vshrl.u32 %v549, 7
        %v551 = vsub.s32 0, %v550
        %v552 = vrot.slane %v548, %v551
        %v553 = vlaneseq
        %v554 = vshrl.u32 %v553, 7
        %v555 = vsub.s32 1, %v554
        %v556 = vrot.slane %v548, %v555
        %vm557 = vcmp.eq.s32.totalorder %v456, %v552
        %vm558 = vcmp.eq.s32.totalorder %v456, %v556
        %vm559 = vcmp.eq.s32.totalorder %v457, %v552
        %vm560 = vcmp.eq.s32.totalorder %v457, %v556
        %v562 = vlaneseq
        %v563 = vshrl.u32 %v562, 7
        %v564 = vsub.s32 0, %v563
        %v565 = vrot.slane %v452, %v564
        %v566 = vlaneseq
        %v567 = vshrl.u32 %v566, 7
        %v568 = vsub.s32 1, %v567
        %v569 = vrot.slane %v452, %v568
        %v572 = vsel %vm557, %v565, 0.0
        %v573 = vsel %vm558, %v569, 0.0
        %v574 = vsel %vm559, %v565, 0.0
        %v575 = vsel %vm560, %v569, 0.0
        %v576 = vadd.f32 %v544, %v572
        %v577 = vadd.f32 %v545, %v573
        %v578 = vadd.f32 %v546, %v574
        %v579 = vadd.f32 %v547, %v575
        %v580 = vld [vmem:[%s382] sm:$0xff]
        %v581 = vld [vmem:[%s382 + $0x8] sm:$0xff]
        %v582 = vld [vmem:[%s382 + $0x10] sm:$0xff]
        %v583 = vld [vmem:[%s382 + $0x18] sm:$0xff]
        %v584 = vld [vmem:[%s382 + $0x20] sm:$0xff]
        %v585 = vld [vmem:[%s382 + $0x28] sm:$0xff]
        %v586 = vld [vmem:[%s382 + $0x30] sm:$0xff]
        %v587 = vld [vmem:[%s382 + $0x38] sm:$0xff]
        %v588 = vpack.c.bf16 %v581, %v580
        %v589 = vpack.c.bf16 %v583, %v582
        %v590 = vpack.c.bf16 %v585, %v584
        %v591 = vpack.c.bf16 %v587, %v586
        %v592 = vpack.c.bf16 %v518, %v516
        %v593 = vpack.c.bf16 %v519, %v517
        %vm594 = vcmask 130048
        %v596 = vsel %vm594, %v588, 0
        %v599 = vsel %vm594, %v589, 0
        %v602 = vsel %vm594, %v590, 0
        %v605 = vsel %vm594, %v591, 0
        %607 = vmatprep.subr.bf16.mxu0 0
        %608 = vmatpush1.bf16.msra.mxu0 0
        %609 = vmatprep.subr.bf16.mxu0 0
        %610 = vmatpush1.bf16.msra.mxu0 0
        %611 = vmatprep.subr.bf16.mxu0 0
        %612 = vmatpush1.bf16.msra.mxu0 0
        %613 = vmatprep.subr.bf16.mxu0 0
        %614 = vmatpush1.bf16.msra.mxu0 0
        %615 = vmatprep.subr.bf16.mxu0 0
        %616 = vmatpush1.bf16.msra.mxu0 0
        %617 = vmatprep.subr.bf16.mxu0 0
        %618 = vmatpush1.bf16.msra.mxu0 0
        %619 = vmatprep.subr.bf16.mxu0 0
        %620 = vmatpush1.bf16.msra.mxu0 0
        %621 = vmatprep.subr.bf16.mxu0 %v593
        %622 = vmatpush1.bf16.msra.mxu0 %v592
        %623 = vmatprep.subr.bf16.mxu0 0
        %624 = vmatpush2.bf16.msra.mxu0 0
        %625 = vmatprep.subr.bf16.mxu0 0
        %626 = vmatpush2.bf16.msra.mxu0 0
        %627 = vmatprep.subr.bf16.mxu0 0
        %628 = vmatpush2.bf16.msra.mxu0 0
        %629 = vmatprep.subr.bf16.mxu0 0
        %630 = vmatpush2.bf16.msra.mxu0 0
        %631 = vmatprep.subr.bf16.mxu0 0
        %632 = vmatpush2.bf16.msra.mxu0 0
        %633 = vmatprep.subr.bf16.mxu0 0
        %634 = vmatpush2.bf16.msra.mxu0 0
        %635 = vmatprep.subr.bf16.mxu0 0
        %636 = vmatpush2.bf16.msra.mxu0 0
        %637 = vmatprep.subr.bf16.mxu0 0
        %638 = vmatpush2.bf16.msra.mxu0 0
        %639 = vmatprep.mubr.bf16.mxu0 0
        %640 = vmatmul.mubr.bf16.gmra.mxu0 %v596
        %v641 = vpop.f32.mrf.mxu0
        %v642 = vadd.f32 0.0, %v641
        %v643 = vpop.f32.mrf.mxu0
        %v644 = vadd.f32 0.0, %v643
        %v645 = vpop.f32.mrf.mxu0
        %v646 = vadd.f32 0.0, %v645
        %v647 = vpop.f32.mrf.mxu0
        %v648 = vadd.f32 0.0, %v647
        %649 = vmatprep.mubr.bf16.mxu0 0
        %650 = vmatmul.mubr.bf16.gmra.mxu0 %v599
        %v651 = vpop.f32.mrf.mxu0
        %v652 = vadd.f32 0.0, %v651
        %v653 = vpop.f32.mrf.mxu0
        %v654 = vadd.f32 0.0, %v653
        %v655 = vpop.f32.mrf.mxu0
        %v656 = vadd.f32 0.0, %v655
        %v657 = vpop.f32.mrf.mxu0
        %v658 = vadd.f32 0.0, %v657
        %659 = vmatprep.mubr.bf16.mxu0 0
        %660 = vmatmul.mubr.bf16.gmra.mxu0 %v602
        %v661 = vpop.f32.mrf.mxu0
        %v662 = vadd.f32 0.0, %v661
        %v663 = vpop.f32.mrf.mxu0
        %v664 = vadd.f32 0.0, %v663
        %v665 = vpop.f32.mrf.mxu0
        %v666 = vadd.f32 0.0, %v665
        %v667 = vpop.f32.mrf.mxu0
        %v668 = vadd.f32 0.0, %v667
        %669 = vmatprep.mubr.bf16.mxu0 0
        %670 = vmatmul.mubr.bf16.gmra.mxu0 %v605
        %v671 = vpop.f32.mrf.mxu0
        %v672 = vadd.f32 0.0, %v671
        %v673 = vpop.f32.mrf.mxu0
        %v674 = vadd.f32 0.0, %v673
        %v675 = vpop.f32.mrf.mxu0
        %v676 = vadd.f32 0.0, %v675
        %v677 = vpop.f32.mrf.mxu0
        %v678 = vadd.f32 0.0, %v677
        %679 = vdwg.mxu0
        %v680 = vmul.f32 %v642, %v576
        %v681 = vmul.f32 %v644, %v577
        %v682 = vmul.f32 %v646, %v578
        %v683 = vmul.f32 %v648, %v579
        %v684 = vmul.f32 %v652, %v576
        %v685 = vmul.f32 %v654, %v577
        %v686 = vmul.f32 %v656, %v578
        %v687 = vmul.f32 %v658, %v579
        %v688 = vmul.f32 %v662, %v576
        %v689 = vmul.f32 %v664, %v577
        %v690 = vmul.f32 %v666, %v578
        %v691 = vmul.f32 %v668, %v579
        %v692 = vmul.f32 %v672, %v576
        %v693 = vmul.f32 %v674, %v577
        %v694 = vmul.f32 %v676, %v578
        %v695 = vmul.f32 %v678, %v579
        %v696 = vadd.f32 %v680, %v682
        %v697 = vrot.slane %v696, 4
        %v698 = vadd.f32 %v696, %v697
        %v699 = vrot.slane %v698, 2
        %v700 = vadd.f32 %v698, %v699
        %v701 = vrot.slane %v700, 1
        %v702 = vadd.f32 %v700, %v701
        %v703 = vadd.f32 %v681, %v683
        %v704 = vrot.slane %v703, 4
        %v705 = vadd.f32 %v703, %v704
        %v706 = vrot.slane %v705, 2
        %v707 = vadd.f32 %v705, %v706
        %v708 = vrot.slane %v707, 1
        %v709 = vadd.f32 %v707, %v708
        %v710 = vadd.f32 %v684, %v686
        %v711 = vrot.slane %v710, 4
        %v712 = vadd.f32 %v710, %v711
        %v713 = vrot.slane %v712, 2
        %v714 = vadd.f32 %v712, %v713
        %v715 = vrot.slane %v714, 1
        %v716 = vadd.f32 %v714, %v715
        %v717 = vadd.f32 %v685, %v687
        %v718 = vrot.slane %v717, 4
        %v719 = vadd.f32 %v717, %v718
        %v720 = vrot.slane %v719, 2
        %v721 = vadd.f32 %v719, %v720
        %v722 = vrot.slane %v721, 1
        %v723 = vadd.f32 %v721, %v722
        %v724 = vadd.f32 %v688, %v690
        %v725 = vrot.slane %v724, 4
        %v726 = vadd.f32 %v724, %v725
        %v727 = vrot.slane %v726, 2
        %v728 = vadd.f32 %v726, %v727
        %v729 = vrot.slane %v728, 1
        %v730 = vadd.f32 %v728, %v729
        %v731 = vadd.f32 %v689, %v691
        %v732 = vrot.slane %v731, 4
        %v733 = vadd.f32 %v731, %v732
        %v734 = vrot.slane %v733, 2
        %v735 = vadd.f32 %v733, %v734
        %v736 = vrot.slane %v735, 1
        %v737 = vadd.f32 %v735, %v736
        %v738 = vadd.f32 %v692, %v694
        %v739 = vrot.slane %v738, 4
        %v740 = vadd.f32 %v738, %v739
        %v741 = vrot.slane %v740, 2
        %v742 = vadd.f32 %v740, %v741
        %v743 = vrot.slane %v742, 1
        %v744 = vadd.f32 %v742, %v743
        %v745 = vadd.f32 %v693, %v695
        %v746 = vrot.slane %v745, 4
        %v747 = vadd.f32 %v745, %v746
        %v748 = vrot.slane %v747, 2
        %v749 = vadd.f32 %v747, %v748
        %v750 = vrot.slane %v749, 1
        %v751 = vadd.f32 %v749, %v750
        %v752 = vld [vmem:[#allocation2] sm:$0xff]
        %v753 = vld [vmem:[#allocation2 + $0x8] sm:$0xff]
        %v754 = vld [vmem:[%s431] sm:$0xff]
        %v755 = vpack.c.bf16 %v754, %v754
        %v756 = vpack.c.bf16 %v702, %v702
        %v757 = vpack.c.bf16 %v709, %v709
        %v758 = vpack.c.bf16 %v716, %v716
        %v759 = vpack.c.bf16 %v723, %v723
        %v760 = vpack.c.bf16 %v730, %v730
        %v761 = vpack.c.bf16 %v737, %v737
        %v762 = vpack.c.bf16 %v744, %v744
        %v763 = vpack.c.bf16 %v751, %v751
        %v772 = vunpack.c.l.b16 %v756
        %v773 = vunpack.c.l.b16 %v757
        %v774 = vunpack.c.l.b16 %v758
        %v775 = vunpack.c.l.b16 %v759
        %v776 = vunpack.c.l.b16 %v760
        %v777 = vunpack.c.l.b16 %v761
        %v778 = vunpack.c.l.b16 %v762
        %v779 = vunpack.c.l.b16 %v763
        %vm780 = vcmask 1041409
        %v781 = vsel %vm780, %v774, %v772
        %vm782 = vcmask 1042434
        %v783 = vsel %vm782, %v776, %v781
        %vm784 = vcmask 1043459
        %v785 = vsel %vm784, %v778, %v783
        %v786 = vsel %vm780, %v775, %v773
        %v787 = vsel %vm782, %v777, %v786
        %v788 = vsel %vm784, %v779, %v787
        %v789 = vpack.c.b16 %v785, %v785
        %v790 = vpack.c.b16 %v788, %v788
        %vm791 = vcmask 31744
        %v793 = vsel %vm791, %v755, 0
        %vm795 = vcmask 1041408
        %v797 = vsel %vm795, %v789, 0
        %v800 = vsel %vm795, %v790, 0
        %802 = vmatprep.subr.bf16.mxu0 0
        %803 = vmatpush1.bf16.msra.mxu0 0
        %804 = vmatprep.subr.bf16.mxu0 0
        %805 = vmatpush1.bf16.msra.mxu0 0
        %806 = vmatprep.subr.bf16.mxu0 0
        %807 = vmatpush1.bf16.msra.mxu0 0
        %808 = vmatprep.subr.bf16.mxu0 0
        %809 = vmatpush1.bf16.msra.mxu0 0
        %810 = vmatprep.subr.bf16.mxu0 0
        %811 = vmatpush1.bf16.msra.mxu0 0
        %812 = vmatprep.subr.bf16.mxu0 0
        %813 = vmatpush1.bf16.msra.mxu0 0
        %814 = vmatprep.subr.bf16.mxu0 0
        %815 = vmatpush1.bf16.msra.mxu0 0
        %816 = vmatprep.subr.bf16.mxu0 %v800
        %817 = vmatpush1.bf16.msra.mxu0 %v797
        %818 = vmatprep.subr.bf16.mxu0 0
        %819 = vmatpush2.bf16.msra.mxu0 0
        %820 = vmatprep.subr.bf16.mxu0 0
        %821 = vmatpush2.bf16.msra.mxu0 0
        %822 = vmatprep.subr.bf16.mxu0 0
        %823 = vmatpush2.bf16.msra.mxu0 0
        %824 = vmatprep.subr.bf16.mxu0 0
        %825 = vmatpush2.bf16.msra.mxu0 0
        %826 = vmatprep.subr.bf16.mxu0 0
        %827 = vmatpush2.bf16.msra.mxu0 0
        %828 = vmatprep.subr.bf16.mxu0 0
        %829 = vmatpush2.bf16.msra.mxu0 0
        %830 = vmatprep.subr.bf16.mxu0 0
        %831 = vmatpush2.bf16.msra.mxu0 0
        %832 = vmatprep.subr.bf16.mxu0 0
        %833 = vmatpush2.bf16.msra.mxu0 0
        %834 = vmatprep.mubr.bf16.mxu0 0
        %835 = vmatmul.mubr.bf16.gmra.mxu0 %v793
        %v836 = vpop.f32.mrf.mxu0
        %v837 = vadd.f32 0.0, %v836
        %v838 = vpop.f32.mrf.mxu0
        %v839 = vadd.f32 0.0, %v838
        %v840 = vpop.f32.mrf.mxu0
        %v841 = vpop.f32.mrf.mxu0
        %842 = vdwg.mxu0
        %v843 = vadd.f32 %v752, %v837
        %v844 = vadd.f32 %v753, %v839
        %845 = vst [vmem:[#allocation2] sm:$0xff] %v843
        %846 = vst [vmem:[#allocation2 + $0x8] sm:$0xff] %v844
        %p847 = scmp.eq.s32.totalorder %s28, 8
        // Predicated region
        $region45: #{tpu_custom_call.1} parent=39 // pred_check
          %p848 = pneg %p847
        $region46: #{tpu_custom_call.1} parent=39 // pred_check_branch
          %850 = sbr.rel (%p848) target = $region48
        $region47: #{tpu_custom_call.1} parent=39 // pred_region
          %v851 = vld [vmem:[#allocation2] sm:$0xff]
          %v852 = vld [vmem:[#allocation2 + $0x8] sm:$0xff]
          %853 = vst [vmem:[%s377] sm:$0xff] %v851
          %854 = vst [vmem:[%s377 + $0x8] sm:$0xff] %v852
        $region48: #{tpu_custom_call.1} parent=39 // pred_fallthru
          _
        %s855 = sand.u32 %s211, 1
        %s856 = scalar_lea.sflag [#allocation4], %s855
        %s857 = sand.u32 %s211, 1
        %s858 = smul.addr %s857, 16
        %s859 = scalar_lea.vmem [#allocation3], %s858
        // Predicated region
        $region49: #{tpu_custom_call.1} parent=39 // pred_check
          %p860 = pneg %p221
        $region50: #{tpu_custom_call.1} parent=39 // pred_check_branch
          %862 = sbr.rel (%p860) target = $region52
        $region51: #{tpu_custom_call.1} parent=39 // pred_region
          %s863 = smul.u32 2, %s27
          %s865 = ssub.s32 256, 256
          %866 = vsyncadd %s856, %s865
          %s867 = smul.addr %s26, 2
          %s868 = sadd.s32 %s863, %s867
          %s869 = smul.addr %s25, 2
          %s870 = sadd.s32 %s868, %s869
          %s871 = smul.addr %s870, 128
          %s872 = scalar_lea.hbm %s5, %s871
          %s874 = sshll.u32 %s859, 4
          %s875 = int_to_ptr.vmem [resolvable:$true] %s874
          %877 = dma.vmem_to_hbm [thread:$0]  %s875, 256, %s872, %s856
        $region52: #{tpu_custom_call.1} parent=39 // pred_fallthru
          _
      $region40: #{tpu_custom_call.1} parent=5 // pred_fallthru
        _
      %p878 = scmp.le.s32.totalorder 2, %s14
      // Predicated region
      $region53: #{tpu_custom_call.1} parent=5 // pred_check
        %p879 = pneg %p878
      $region54: #{tpu_custom_call.1} parent=5 // pred_check_branch
        %881 = sbr.rel (%p879) target = $region56
      $region55: #{tpu_custom_call.1} parent=5 // pred_region
        %s882 = ssub.s32 %s14, 2
        // Predicated region
        $region57: #{tpu_custom_call.1} parent=55 // pred_check
          %p883 = pneg %p227
        $region58: #{tpu_custom_call.1} parent=55 // pred_check_branch
          %885 = sbr.rel (%p883) target = $region60
        $region59: #{tpu_custom_call.1} parent=55 // pred_region
          %s886 = sand.u32 %s212, 1
          %s887 = scalar_lea.sflag [#allocation4], %s886
          %s888 = sand.u32 %s212, 1
          %s889 = smul.addr %s888, 16
          %s890 = scalar_lea.vmem [#allocation3], %s889
          %891 = dma.done %s887, 256
        $region60: #{tpu_custom_call.1} parent=55 // pred_fallthru
          _
      $region56: #{tpu_custom_call.1} parent=5 // pred_fallthru
        _
    $region6: #{tpu_custom_call.1} parent=1 // loop_footer
      %s18 = sadd.s32 1, %s14
    $region7: #{tpu_custom_call.1} parent=1 // loop_footer_branch
      %13 = sbr.rel target = $region3
    $region8: #{tpu_custom_call.1} parent=1 // loop_exit
      _
    %892 = vsyncpa [#allocation4], 1
    %s893 = scalar_lea.sflag [#allocation4], 1
    %894 = vsyncpa %s893, 1

</llo_original>
